<compile_context>
chip_gen: v5e
topology: v5e:2x2
jax: 0.10.0
libtpu: 0.0.40
codegen_flags: <defaults>
</compile_context>

<pallas_src>
import functools
import math

import jax
import jax.numpy as jnp
from jax.experimental import pallas as pl
from jax.experimental.pallas import tpu as pltpu


def _mha_kernel(x_ref, wqT_ref, wkT_ref, wvT_ref, out_ref, *, head, d_head):
    """Per-batch multi-head causal attention.

    x_ref   : (1, S, D) bf16   current batch row of the input
    w*T_ref : (D, D)    bf16   pre-transposed projection weights (in, out);
                               wqT already carries the 1/sqrt(d_head) scale.
    out_ref : (1, S, D) bf16   heads concatenated on the last (lane) axis
    """
    x = x_ref[0]                                   # (S, D)
    S = x.shape[0]

    # Fused, lane-dense projections over the full model dim (one MXU pass each),
    # f32 accumulation, bf16 operands for the downstream matmuls.
    q = jnp.dot(x, wqT_ref[...], preferred_element_type=jnp.float32).astype(jnp.bfloat16)
    k = jnp.dot(x, wkT_ref[...], preferred_element_type=jnp.float32).astype(jnp.bfloat16)
    v = jnp.dot(x, wvT_ref[...], preferred_element_type=jnp.float32).astype(jnp.bfloat16)

    # Causal mask built once (hoisted out of the head loop).
    row = jax.lax.broadcasted_iota(jnp.int32, (S, S), 0)
    col = jax.lax.broadcasted_iota(jnp.int32, (S, S), 1)
    causal = col <= row                            # lower-triangular mask

    # TODO(synk): for large head counts / sequence lengths this unrolled per-head
    # loop should become a batched, kv-tiled (flash-style) formulation to bound
    # vreg/VMEM pressure; fine at small H and S.
    outs = []
    for h in range(head):
        lo = h * d_head
        hi = lo + d_head
        q_h = q[:, lo:hi]                          # (S, dh)
        k_h = k[:, lo:hi]
        v_h = v[:, lo:hi]

        # QK^T without transposing k: contract the last dim of both operands.
        s = jax.lax.dot_general(
            q_h, k_h, (((1,), (1,)), ((), ())),
            preferred_element_type=jnp.float32)    # (S, S) f32
        s = jnp.where(causal, s, -jnp.inf)         # diag always unmasked -> safe

        # Softmax statistics in f32; divide on the EUP via approx reciprocal.
        m = jnp.max(s, axis=-1, keepdims=True)
        p = jnp.exp(s - m)
        l = jnp.sum(p, axis=-1, keepdims=True)
        p = p * pl.reciprocal(l, approx=True)

        o_h = jnp.dot(p.astype(jnp.bfloat16), v_h,
                      preferred_element_type=jnp.float32)          # (S, dh)
        outs.append(o_h)

    # Single lane-dense store for the whole batch row.
    out_ref[0] = jnp.concatenate(outs, axis=-1).astype(out_ref.dtype)


def _output_proj_kernel(z_ref, woT_ref, bo_ref, out_ref):
    """Output linear on a row tile: y = z @ WoT + bo.

    z_ref: (TM, D) bf16, woT_ref: (D, D) bf16, bo_ref: (1, D) f32, out_ref: (TM, D) f32.
    """
    acc = jnp.dot(z_ref[...], woT_ref[...], preferred_element_type=jnp.float32)
    out_ref[...] = (acc + bo_ref[...]).astype(out_ref.dtype)


def casual_self_attention(x, wq, wk, wv, wo, bo, *, head):
    B, S, D = x.shape
    d_head = D // head
    scale = 1.0 / math.sqrt(float(d_head))

    # One-time layout glue in the wrapper (not in the hot kernels):
    #  * bf16 matmul operands (halves HBM/VMEM bytes, f32 accumulation in-kernel),
    #  * pre-transpose torch (out,in) weights so kernels do plain (M,K)x(K,N),
    #  * 1/sqrt(dh) folded into Wq (fuses into the same transpose/convert op).
    x_bf = x.astype(jnp.bfloat16)
    wqT = (wq * scale).T.astype(jnp.bfloat16)
    wkT = wk.T.astype(jnp.bfloat16)
    wvT = wv.T.astype(jnp.bfloat16)
    woT = wo.T.astype(jnp.bfloat16)
    bo2d = bo.reshape(1, D).astype(jnp.float32)

    # Stage 1: per-batch fused-projection causal attention, lane-dense (1,S,D) output.
    att = pl.pallas_call(
        functools.partial(_mha_kernel, head=head, d_head=d_head),
        out_shape=jax.ShapeDtypeStruct((B, S, D), jnp.bfloat16),
        grid=(B,),
        in_specs=[
            pl.BlockSpec((1, S, D), lambda b: (b, 0, 0)),
            pl.BlockSpec((D, D), lambda b: (0, 0)),   # weights resident across grid
            pl.BlockSpec((D, D), lambda b: (0, 0)),
            pl.BlockSpec((D, D), lambda b: (0, 0)),
        ],
        out_specs=pl.BlockSpec((1, S, D), lambda b: (b, 0, 0)),
        compiler_params=pltpu.CompilerParams(
            dimension_semantics=("parallel",)),
    )(x_bf, wqT, wkT, wvT)

    # Wrapper-side layout plumbing: reproduce PyTorch's broadcast-quirk flatten,
    # i.e. row-major (H, B, S, dh) order viewed as (B*S, D).
    z = att.reshape(B, S, head, d_head).transpose(2, 0, 1, 3).reshape(B * S, D)

    # Stage 2: row-tiled, pipelined output projection; Wo/bo resident.
    BS = B * S
    TM = BS if BS <= 512 else 512
    y = pl.pallas_call(
        _output_proj_kernel,
        out_shape=jax.ShapeDtypeStruct((BS, D), jnp.float32),
        grid=(pl.cdiv(BS, TM),),
        in_specs=[
            pl.BlockSpec((TM, D), lambda i: (i, 0)),
            pl.BlockSpec((D, D), lambda i: (0, 0)),
            pl.BlockSpec((1, D), lambda i: (0, 0)),
        ],
        out_specs=pl.BlockSpec((TM, D), lambda i: (i, 0)),
        compiler_params=pltpu.CompilerParams(
            dimension_semantics=("parallel",)),
    )(z, woT, bo2d)

    return y.reshape(B, S, D)


def _reference(x, wq, wk, wv, wo, bo, *, head):
    """Pure-JAX f32 transcription of the PyTorch forward (incl. the broadcast quirk)."""
    B, S, D = x.shape
    dh = D // head
    q = (x @ wq.T).reshape(B, S, head, dh).transpose(0, 2, 1, 3)
    k = (x @ wk.T).reshape(B, S, head, dh).transpose(0, 2, 1, 3)
    v = (x @ wv.T).reshape(B, S, head, dh).transpose(0, 2, 1, 3)
    score = (q @ jnp.swapaxes(k, -2, -1)) / jnp.sqrt(jnp.float32(dh))   # (B,H,S,S)
    mask = jnp.tril(jnp.ones((S, S), jnp.float32))[None, None, None]    # (1,1,1,S,S)
    score = jnp.where(mask == 0, -jnp.inf, score[None])                 # (1,B,H,S,S)
    att = jax.nn.softmax(score, axis=-1)
    exp = att @ v                                                       # (1,B,H,S,dh)
    concat = jnp.swapaxes(exp, 1, 2).reshape(B, S, D)                   # buggy flatten
    return concat @ wo.T + bo


if __name__ == "__main__":
    # Small shapes: batch=2, sentence_length=8, d_model=32, head=4 (d_head=8).
    B, S, D, H = 2, 8, 32, 4

    key = jax.random.PRNGKey(0)
    kx, kq, kk, kv, ko, kb = jax.random.split(key, 6)
    x = jax.random.normal(kx, (B, S, D), jnp.float32)
    wq = jax.random.normal(kq, (D, D), jnp.float32) * 0.05
    wk = jax.random.normal(kk, (D, D), jnp.float32) * 0.05
    wv = jax.random.normal(kv, (D, D), jnp.float32) * 0.05
    wo = jax.random.normal(ko, (D, D), jnp.float32) * 0.05
    bo = jax.random.normal(kb, (D,), jnp.float32) * 0.05

    out = casual_self_attention(x, wq, wk, wv, wo, bo, head=H)
    out = jax.block_until_ready(out)

    ref = _reference(x, wq, wk, wv, wo, bo, head=H)
    assert out.shape == (B, S, D)
    # bf16 matmul operands + approx reciprocal -> compare at bf16-appropriate tolerance.
    assert jnp.allclose(out, ref, rtol=3e-2, atol=3e-2), (
        f"max abs diff {jnp.max(jnp.abs(out - ref))}"
    )
    print("KERNEL_OK")
</pallas_src>

<mosaic_0001>
module attributes {stable_mosaic.version = 11 : i64} {
  func.func @_mha_kernel(%arg0: i32, %arg1: memref<1x8x32xbf16, #tpu.memory_space<vmem>>, %arg2: memref<32x32xbf16, #tpu.memory_space<vmem>>, %arg3: memref<32x32xbf16, #tpu.memory_space<vmem>>, %arg4: memref<32x32xbf16, #tpu.memory_space<vmem>>, %arg5: memref<1x8x32xbf16, #tpu.memory_space<vmem>>) attributes {dimension_semantics = [#tpu.dimension_semantics<parallel>], iteration_bounds = array<i64: 2>, scalar_prefetch = 0 : i64, scratch_operands = 0 : i64, tpu.core_type = #tpu.core_type<tc>, window_params = [{transform_indices = @transform_0, window_bounds = array<i64: 1, 8, 32>}, {pipeline_mode = #tpu.pipeline_mode<synchronous>, transform_indices = @transform_1, window_bounds = array<i64: 32, 32>}, {pipeline_mode = #tpu.pipeline_mode<synchronous>, transform_indices = @transform_2, window_bounds = array<i64: 32, 32>}, {pipeline_mode = #tpu.pipeline_mode<synchronous>, transform_indices = @transform_3, window_bounds = array<i64: 32, 32>}, {transform_indices = @transform_4, window_bounds = array<i64: 1, 8, 32>}]} {
    %c0 = arith.constant 0 : index
    %c0_0 = arith.constant 0 : index
    %c0_1 = arith.constant 0 : index
    %0 = vector.load %arg1[%c0, %c0_0, %c0_1] : memref<1x8x32xbf16, #tpu.memory_space<vmem>>, vector<1x8x32xbf16>
    %1 = vector.shape_cast %0 : vector<1x8x32xbf16> to vector<8x32xbf16>
    %c0_2 = arith.constant 0 : index
    %c0_3 = arith.constant 0 : index
    %2 = vector.load %arg2[%c0_2, %c0_3] : memref<32x32xbf16, #tpu.memory_space<vmem>>, vector<32x32xbf16>
    %cst = arith.constant dense<0.000000e+00> : vector<8x32xf32>
    %3 = tpu.matmul %1, %2, %cst {dimension_numbers = #tpu.dot_dimension_numbers<[1], [0], [0], [1], [0, 0, 1, 1], [], []>} : vector<8x32xbf16>, vector<32x32xbf16>, vector<8x32xf32> -> vector<8x32xf32>
    %4 = arith.truncf %3 : vector<8x32xf32> to vector<8x32xbf16>
    %c0_4 = arith.constant 0 : index
    %c0_5 = arith.constant 0 : index
    %5 = vector.load %arg3[%c0_4, %c0_5] : memref<32x32xbf16, #tpu.memory_space<vmem>>, vector<32x32xbf16>
    %cst_6 = arith.constant dense<0.000000e+00> : vector<8x32xf32>
    %6 = tpu.matmul %1, %5, %cst_6 {dimension_numbers = #tpu.dot_dimension_numbers<[1], [0], [0], [1], [0, 0, 1, 1], [], []>} : vector<8x32xbf16>, vector<32x32xbf16>, vector<8x32xf32> -> vector<8x32xf32>
    %7 = arith.truncf %6 : vector<8x32xf32> to vector<8x32xbf16>
    %c0_7 = arith.constant 0 : index
    %c0_8 = arith.constant 0 : index
    %8 = vector.load %arg4[%c0_7, %c0_8] : memref<32x32xbf16, #tpu.memory_space<vmem>>, vector<32x32xbf16>
    %cst_9 = arith.constant dense<0.000000e+00> : vector<8x32xf32>
    %9 = tpu.matmul %1, %8, %cst_9 {dimension_numbers = #tpu.dot_dimension_numbers<[1], [0], [0], [1], [0, 0, 1, 1], [], []>} : vector<8x32xbf16>, vector<32x32xbf16>, vector<8x32xf32> -> vector<8x32xf32>
    %10 = arith.truncf %9 : vector<8x32xf32> to vector<8x32xbf16>
    %11 = tpu.iota {dimensions = array<i32: 0>} : vector<8x8xi32>
    %12 = tpu.iota {dimensions = array<i32: 1>} : vector<8x8xi32>
    %13 = arith.cmpi sle, %12, %11 : vector<8x8xi32>
    %14 = vector.extract_strided_slice %4 {offsets = [0, 0], sizes = [8, 8], strides = [1, 1]} : vector<8x32xbf16> to vector<8x8xbf16>
    %15 = vector.extract_strided_slice %7 {offsets = [0, 0], sizes = [8, 8], strides = [1, 1]} : vector<8x32xbf16> to vector<8x8xbf16>
    %16 = vector.extract_strided_slice %10 {offsets = [0, 0], sizes = [8, 8], strides = [1, 1]} : vector<8x32xbf16> to vector<8x8xbf16>
    %cst_10 = arith.constant dense<0.000000e+00> : vector<8x8xf32>
    %17 = tpu.matmul %14, %15, %cst_10 {dimension_numbers = #tpu.dot_dimension_numbers<[1], [1], [0], [0], [0, 0, 1, 0], [], []>} : vector<8x8xbf16>, vector<8x8xbf16>, vector<8x8xf32> -> vector<8x8xf32>
    %cst_11 = arith.constant 0xFF800000 : f32
    %18 = vector.broadcast %cst_11 : f32 to vector<8x8xf32>
    %19 = arith.select %13, %17, %18 : vector<8x8xi1>, vector<8x8xf32>
    %cst_12 = arith.constant dense<0xFF800000> : vector<8xf32>
    %20 = vector.multi_reduction <maximumf>, %19, %cst_12 [1] : vector<8x8xf32> to vector<8xf32>
    %21 = vector.shape_cast %20 : vector<8xf32> to vector<8x1xf32>
    %22 = vector.broadcast %21 : vector<8x1xf32> to vector<8x8xf32>
    %23 = arith.subf %19, %22 : vector<8x8xf32>
    %24 = math.exp %23 : vector<8x8xf32>
    %cst_13 = arith.constant dense<0.000000e+00> : vector<8xf32>
    %25 = vector.multi_reduction <add>, %24, %cst_13 [1] : vector<8x8xf32> to vector<8xf32>
    %26 = vector.shape_cast %25 : vector<8xf32> to vector<8x1xf32>
    %27 = tpu.reciprocal %26 {approx = true} : vector<8x1xf32> -> vector<8x1xf32>
    %28 = vector.broadcast %27 : vector<8x1xf32> to vector<8x8xf32>
    %29 = arith.mulf %24, %28 : vector<8x8xf32>
    %30 = arith.truncf %29 : vector<8x8xf32> to vector<8x8xbf16>
    %cst_14 = arith.constant dense<0.000000e+00> : vector<8x8xf32>
    %31 = tpu.matmul %30, %16, %cst_14 {dimension_numbers = #tpu.dot_dimension_numbers<[1], [0], [0], [1], [0, 0, 1, 1], [], []>} : vector<8x8xbf16>, vector<8x8xbf16>, vector<8x8xf32> -> vector<8x8xf32>
    %32 = vector.extract_strided_slice %4 {offsets = [0, 8], sizes = [8, 8], strides = [1, 1]} : vector<8x32xbf16> to vector<8x8xbf16>
    %33 = vector.extract_strided_slice %7 {offsets = [0, 8], sizes = [8, 8], strides = [1, 1]} : vector<8x32xbf16> to vector<8x8xbf16>
    %34 = vector.extract_strided_slice %10 {offsets = [0, 8], sizes = [8, 8], strides = [1, 1]} : vector<8x32xbf16> to vector<8x8xbf16>
    %cst_15 = arith.constant dense<0.000000e+00> : vector<8x8xf32>
    %35 = tpu.matmul %32, %33, %cst_15 {dimension_numbers = #tpu.dot_dimension_numbers<[1], [1], [0], [0], [0, 0, 1, 0], [], []>} : vector<8x8xbf16>, vector<8x8xbf16>, vector<8x8xf32> -> vector<8x8xf32>
    %cst_16 = arith.constant 0xFF800000 : f32
    %36 = vector.broadcast %cst_16 : f32 to vector<8x8xf32>
    %37 = arith.select %13, %35, %36 : vector<8x8xi1>, vector<8x8xf32>
    %cst_17 = arith.constant dense<0xFF800000> : vector<8xf32>
    %38 = vector.multi_reduction <maximumf>, %37, %cst_17 [1] : vector<8x8xf32> to vector<8xf32>
    %39 = vector.shape_cast %38 : vector<8xf32> to vector<8x1xf32>
    %40 = vector.broadcast %39 : vector<8x1xf32> to vector<8x8xf32>
    %41 = arith.subf %37, %40 : vector<8x8xf32>
    %42 = math.exp %41 : vector<8x8xf32>
    %cst_18 = arith.constant dense<0.000000e+00> : vector<8xf32>
    %43 = vector.multi_reduction <add>, %42, %cst_18 [1] : vector<8x8xf32> to vector<8xf32>
    %44 = vector.shape_cast %43 : vector<8xf32> to vector<8x1xf32>
    %45 = tpu.reciprocal %44 {approx = true} : vector<8x1xf32> -> vector<8x1xf32>
    %46 = vector.broadcast %45 : vector<8x1xf32> to vector<8x8xf32>
    %47 = arith.mulf %42, %46 : vector<8x8xf32>
    %48 = arith.truncf %47 : vector<8x8xf32> to vector<8x8xbf16>
    %cst_19 = arith.constant dense<0.000000e+00> : vector<8x8xf32>
    %49 = tpu.matmul %48, %34, %cst_19 {dimension_numbers = #tpu.dot_dimension_numbers<[1], [0], [0], [1], [0, 0, 1, 1], [], []>} : vector<8x8xbf16>, vector<8x8xbf16>, vector<8x8xf32> -> vector<8x8xf32>
    %50 = vector.extract_strided_slice %4 {offsets = [0, 16], sizes = [8, 8], strides = [1, 1]} : vector<8x32xbf16> to vector<8x8xbf16>
    %51 = vector.extract_strided_slice %7 {offsets = [0, 16], sizes = [8, 8], strides = [1, 1]} : vector<8x32xbf16> to vector<8x8xbf16>
    %52 = vector.extract_strided_slice %10 {offsets = [0, 16], sizes = [8, 8], strides = [1, 1]} : vector<8x32xbf16> to vector<8x8xbf16>
    %cst_20 = arith.constant dense<0.000000e+00> : vector<8x8xf32>
    %53 = tpu.matmul %50, %51, %cst_20 {dimension_numbers = #tpu.dot_dimension_numbers<[1], [1], [0], [0], [0, 0, 1, 0], [], []>} : vector<8x8xbf16>, vector<8x8xbf16>, vector<8x8xf32> -> vector<8x8xf32>
    %cst_21 = arith.constant 0xFF800000 : f32
    %54 = vector.broadcast %cst_21 : f32 to vector<8x8xf32>
    %55 = arith.select %13, %53, %54 : vector<8x8xi1>, vector<8x8xf32>
    %cst_22 = arith.constant dense<0xFF800000> : vector<8xf32>
    %56 = vector.multi_reduction <maximumf>, %55, %cst_22 [1] : vector<8x8xf32> to vector<8xf32>
    %57 = vector.shape_cast %56 : vector<8xf32> to vector<8x1xf32>
    %58 = vector.broadcast %57 : vector<8x1xf32> to vector<8x8xf32>
    %59 = arith.subf %55, %58 : vector<8x8xf32>
    %60 = math.exp %59 : vector<8x8xf32>
    %cst_23 = arith.constant dense<0.000000e+00> : vector<8xf32>
    %61 = vector.multi_reduction <add>, %60, %cst_23 [1] : vector<8x8xf32> to vector<8xf32>
    %62 = vector.shape_cast %61 : vector<8xf32> to vector<8x1xf32>
    %63 = tpu.reciprocal %62 {approx = true} : vector<8x1xf32> -> vector<8x1xf32>
    %64 = vector.broadcast %63 : vector<8x1xf32> to vector<8x8xf32>
    %65 = arith.mulf %60, %64 : vector<8x8xf32>
    %66 = arith.truncf %65 : vector<8x8xf32> to vector<8x8xbf16>
    %cst_24 = arith.constant dense<0.000000e+00> : vector<8x8xf32>
    %67 = tpu.matmul %66, %52, %cst_24 {dimension_numbers = #tpu.dot_dimension_numbers<[1], [0], [0], [1], [0, 0, 1, 1], [], []>} : vector<8x8xbf16>, vector<8x8xbf16>, vector<8x8xf32> -> vector<8x8xf32>
    %68 = vector.extract_strided_slice %4 {offsets = [0, 24], sizes = [8, 8], strides = [1, 1]} : vector<8x32xbf16> to vector<8x8xbf16>
    %69 = vector.extract_strided_slice %7 {offsets = [0, 24], sizes = [8, 8], strides = [1, 1]} : vector<8x32xbf16> to vector<8x8xbf16>
    %70 = vector.extract_strided_slice %10 {offsets = [0, 24], sizes = [8, 8], strides = [1, 1]} : vector<8x32xbf16> to vector<8x8xbf16>
    %cst_25 = arith.constant dense<0.000000e+00> : vector<8x8xf32>
    %71 = tpu.matmul %68, %69, %cst_25 {dimension_numbers = #tpu.dot_dimension_numbers<[1], [1], [0], [0], [0, 0, 1, 0], [], []>} : vector<8x8xbf16>, vector<8x8xbf16>, vector<8x8xf32> -> vector<8x8xf32>
    %cst_26 = arith.constant 0xFF800000 : f32
    %72 = vector.broadcast %cst_26 : f32 to vector<8x8xf32>
    %73 = arith.select %13, %71, %72 : vector<8x8xi1>, vector<8x8xf32>
    %cst_27 = arith.constant dense<0xFF800000> : vector<8xf32>
    %74 = vector.multi_reduction <maximumf>, %73, %cst_27 [1] : vector<8x8xf32> to vector<8xf32>
    %75 = vector.shape_cast %74 : vector<8xf32> to vector<8x1xf32>
    %76 = vector.broadcast %75 : vector<8x1xf32> to vector<8x8xf32>
    %77 = arith.subf %73, %76 : vector<8x8xf32>
    %78 = math.exp %77 : vector<8x8xf32>
    %cst_28 = arith.constant dense<0.000000e+00> : vector<8xf32>
    %79 = vector.multi_reduction <add>, %78, %cst_28 [1] : vector<8x8xf32> to vector<8xf32>
    %80 = vector.shape_cast %79 : vector<8xf32> to vector<8x1xf32>
    %81 = tpu.reciprocal %80 {approx = true} : vector<8x1xf32> -> vector<8x1xf32>
    %82 = vector.broadcast %81 : vector<8x1xf32> to vector<8x8xf32>
    %83 = arith.mulf %78, %82 : vector<8x8xf32>
    %84 = arith.truncf %83 : vector<8x8xf32> to vector<8x8xbf16>
    %cst_29 = arith.constant dense<0.000000e+00> : vector<8x8xf32>
    %85 = tpu.matmul %84, %70, %cst_29 {dimension_numbers = #tpu.dot_dimension_numbers<[1], [0], [0], [1], [0, 0, 1, 1], [], []>} : vector<8x8xbf16>, vector<8x8xbf16>, vector<8x8xf32> -> vector<8x8xf32>
    %86 = tpu.concatenate %31, %49, %67, %85 in 1 : vector<8x8xf32>, vector<8x8xf32>, vector<8x8xf32>, vector<8x8xf32> -> vector<8x32xf32>
    %87 = arith.truncf %86 : vector<8x32xf32> to vector<8x32xbf16>
    %c0_30 = arith.constant 0 : index
    %c0_31 = arith.constant 0 : index
    %c0_32 = arith.constant 0 : index
    %88 = vector.load %arg5[%c0_30, %c0_31, %c0_32] : memref<1x8x32xbf16, #tpu.memory_space<vmem>>, vector<1x8x32xbf16>
    %89 = vector.shape_cast %88 : vector<1x8x32xbf16> to vector<8x32xbf16>
    %90 = vector.shape_cast %87 : vector<8x32xbf16> to vector<1x8x32xbf16>
    tpu.vector_store %arg5[%c0_30, %c0_31, %c0_32], %90 {strides = array<i32>} : memref<1x8x32xbf16, #tpu.memory_space<vmem>>, vector<1x8x32xbf16>,
    return
  }
  func.func @transform_0(%arg0: i32) -> (i32, i32, i32) {
    %c0_i32 = arith.constant 0 : i32
    %c0_i32_0 = arith.constant 0 : i32
    %c0_i32_1 = arith.constant 0 : i32
    return %arg0, %c0_i32, %c0_i32_0 : i32, i32, i32
  }
  func.func @transform_1(%arg0: i32) -> (i32, i32) {
    %c0_i32 = arith.constant 0 : i32
    %c0_i32_0 = arith.constant 0 : i32
    %c0_i32_1 = arith.constant 0 : i32
    return %c0_i32, %c0_i32_0 : i32, i32
  }
  func.func @transform_2(%arg0: i32) -> (i32, i32) {
    %c0_i32 = arith.constant 0 : i32
    %c0_i32_0 = arith.constant 0 : i32
    %c0_i32_1 = arith.constant 0 : i32
    return %c0_i32, %c0_i32_0 : i32, i32
  }
  func.func @transform_3(%arg0: i32) -> (i32, i32) {
    %c0_i32 = arith.constant 0 : i32
    %c0_i32_0 = arith.constant 0 : i32
    %c0_i32_1 = arith.constant 0 : i32
    return %c0_i32, %c0_i32_0 : i32, i32
  }
  func.func @transform_4(%arg0: i32) -> (i32, i32, i32) {
    %c0_i32 = arith.constant 0 : i32
    %c0_i32_0 = arith.constant 0 : i32
    %c0_i32_1 = arith.constant 0 : i32
    return %arg0, %c0_i32, %c0_i32_0 : i32, i32, i32
  }
}

</mosaic_0001>

<llo_original>
// kernel: tpu_custom_call.1
$region0: #{tpu_custom_call.1}
  #allocation0 [shape = 'u32[]', space=smem, size = 0x4, offset = 0x4, fixed_abs, tag = 'smem constant byte address 0x4 - core index']
  #allocation1 [shape = 'u32[72,128]{1,0:T(1,128)}', space=vmem, size = 0x9000, scoped, tag = 'internal scratch']
  %s0 = inlined_call_operand.hbm [shape: bf16[2,8,32], index: 0, kind: input, shape index: {}]
  %s1 = inlined_call_operand.hbm [shape: bf16[32,32], index: 1, kind: input, shape index: {}]
  %s2 = inlined_call_operand.hbm [shape: bf16[32,32], index: 2, kind: input, shape index: {}]
  %s3 = inlined_call_operand.hbm [shape: bf16[32,32], index: 3, kind: input, shape index: {}]
  %s4 = inlined_call_operand.hbm [shape: bf16[2,8,32], index: 4, kind: output, shape index: {}]
  %s5 = sld [smem:[#allocation0]]
  $region65: #{tpu_custom_call.1} parent=0
    _
  %s7 = ssub.s32 1, %s5
  %s8 = scalar_select 0, %s7, %s5
  $region1: #{tpu_custom_call.1} parent=0
    #allocation2 [shape = 'u8[4096]{0}', space=vmem, size = 0x1000, scoped, tag = 'input window, operand 0']
    #allocation3 [shape = 's32[2]{0}', space=sflag, size = 0x8, scoped, tag = 'scoped memory for tpu_custom_call.1']
    #allocation4 [shape = 's32[2]{0}', space=sflag, size = 0x8, scoped, tag = 'scoped memory for tpu_custom_call.1']
    #allocation5 [shape = 'u8[8192]{0}', space=vmem, size = 0x2000, scoped, tag = 'input window, operand 1, single buffered']
    #allocation6 [shape = 's32[1]{0}', space=sflag, size = 0x4, scoped, tag = 'scoped memory for tpu_custom_call.1']
    #allocation7 [shape = 'u8[8192]{0}', space=vmem, size = 0x2000, scoped, tag = 'input window, operand 2, single buffered']
    #allocation8 [shape = 'u8[8192]{0}', space=vmem, size = 0x2000, scoped, tag = 'input window, operand 3, single buffered']
    #allocation9 [shape = 's32[1]{0}', space=sflag, size = 0x4, scoped, tag = 'scoped memory for tpu_custom_call.1']
    #allocation10 [shape = 'u8[4096]{0}', space=vmem, size = 0x1000, scoped, tag = 'output window, operand 0']
    %9 = vsyncpa [#allocation3], 0
    %s10 = scalar_lea.sflag [#allocation3], 1
    %11 = vsyncpa %s10, 0
    %12 = vsyncpa [#allocation6], 0
    %13 = vsyncpa [#allocation9], 0
    %14 = vsyncpa [#allocation4], 0
    %s15 = scalar_lea.sflag [#allocation4], 1
    %16 = vsyncpa %s15, 0
    loop: start=0, step=1, limit=4
    $region2: #{tpu_custom_call.1} parent=1 // loop_pre_header
      _
    $region3: #{tpu_custom_call.1} parent=1 // loop_header
      %s18 = sphi 0, %s22
      %p19 = scmp.ge.s32.totalorder %s18, 4
      %s28 = sphi 0, %s30
      %s31 = sphi 0, %s28
      %s32 = sphi 0, %s31
      %s48 = sphi 0, %s32
      %s52 = sphi 0, %s52
      %s54 = sphi 0, %s52
      %s55 = sphi 0, %s54
      %s69 = sphi 0, %s55
      %s73 = sphi 0, %s73
      %s75 = sphi 0, %s73
      %s76 = sphi 0, %s75
      %s90 = sphi 0, %s76
      %s94 = sphi 0, %s94
      %s96 = sphi 0, %s94
      %s97 = sphi 0, %s96
      %s111 = sphi 0, %s97
      %s117 = sphi 0, %s119
      %s120 = sphi 0, %s117
      %s121 = sphi 0, %s120
      %s137 = sphi 0, %s121
    $region4: #{tpu_custom_call.1} parent=1 // loop_header_branch
      %21 = sbr.rel (%p19) target = $region8
    $region5: #{tpu_custom_call.1} parent=1 // loop_body
      %s23 = ssub.s32 %s18, 1
      %s24 = ssub.s32 %s18, 2
      %s25 = sadd.s32 %s18, 1
      %s26 = ssub.s32 %s18, %s25
      %p27 = scmp.eq.s32.totalorder %s26, 0
      %s29 = sadd.s32 %s28, 1
      %s30 = scalar_select %p27, %s28, %s29
      %p33 = pneg %p27
      %p34 = scmp.eq.s32.totalorder %s18, 1
      %p35 = por %p33, %p34
      %p36 = scmp.ne.s32.totalorder %s28, %s31
      %p37 = scmp.eq.s32.totalorder %s18, 0
      %p38 = por %p36, %p37
      %p39 = scmp.ne.s32.totalorder %s28, %s31
      %p40 = scmp.eq.s32.totalorder %s23, 1
      %p41 = por %p39, %p40
      %p42 = scmp.ne.s32.totalorder %s31, %s32
      %p43 = scmp.eq.s32.totalorder %s23, 0
      %p44 = por %p42, %p43
      %p45 = scmp.ne.s32.totalorder %s31, %s32
      %p46 = scmp.eq.s32.totalorder %s24, 1
      %p47 = por %p45, %p46
      %p49 = scmp.ne.s32.totalorder %s32, %s48
      %p50 = scmp.eq.s32.totalorder %s24, 0
      %p51 = por %p49, %p50
      %s53 = sadd.s32 %s52, 1
      %p56 = scmp.eq.s32.totalorder %s18, 1
      %p57 = scmp.ne.s32.totalorder %s52, %s54
      %p58 = scmp.eq.s32.totalorder %s18, 0
      %p59 = por %p57, %p58
      %p60 = scmp.ne.s32.totalorder %s52, %s54
      %p61 = scmp.eq.s32.totalorder %s23, 1
      %p62 = por %p60, %p61
      %p63 = scmp.ne.s32.totalorder %s54, %s55
      %p64 = scmp.eq.s32.totalorder %s23, 0
      %p65 = por %p63, %p64
      %p66 = scmp.ne.s32.totalorder %s54, %s55
      %p67 = scmp.eq.s32.totalorder %s24, 1
      %p68 = por %p66, %p67
      %p70 = scmp.ne.s32.totalorder %s55, %s69
      %p71 = scmp.eq.s32.totalorder %s24, 0
      %p72 = por %p70, %p71
      %s74 = sadd.s32 %s73, 1
      %p77 = scmp.eq.s32.totalorder %s18, 1
      %p78 = scmp.ne.s32.totalorder %s73, %s75
      %p79 = scmp.eq.s32.totalorder %s18, 0
      %p80 = por %p78, %p79
      %p81 = scmp.ne.s32.totalorder %s73, %s75
      %p82 = scmp.eq.s32.totalorder %s23, 1
      %p83 = por %p81, %p82
      %p84 = scmp.ne.s32.totalorder %s75, %s76
      %p85 = scmp.eq.s32.totalorder %s23, 0
      %p86 = por %p84, %p85
      %p87 = scmp.ne.s32.totalorder %s75, %s76
      %p88 = scmp.eq.s32.totalorder %s24, 1
      %p89 = por %p87, %p88
      %p91 = scmp.ne.s32.totalorder %s76, %s90
      %p92 = scmp.eq.s32.totalorder %s24, 0
      %p93 = por %p91, %p92
      %s95 = sadd.s32 %s94, 1
      %p98 = scmp.eq.s32.totalorder %s18, 1
      %p99 = scmp.ne.s32.totalorder %s94, %s96
      %p100 = scmp.eq.s32.totalorder %s18, 0
      %p101 = por %p99, %p100
      %p102 = scmp.ne.s32.totalorder %s94, %s96
      %p103 = scmp.eq.s32.totalorder %s23, 1
      %p104 = por %p102, %p103
      %p105 = scmp.ne.s32.totalorder %s96, %s97
      %p106 = scmp.eq.s32.totalorder %s23, 0
      %p107 = por %p105, %p106
      %p108 = scmp.ne.s32.totalorder %s96, %s97
      %p109 = scmp.eq.s32.totalorder %s24, 1
      %p110 = por %p108, %p109
      %p112 = scmp.ne.s32.totalorder %s97, %s111
      %p113 = scmp.eq.s32.totalorder %s24, 0
      %p114 = por %p112, %p113
      %s115 = ssub.s32 %s18, %s25
      %p116 = scmp.eq.s32.totalorder %s115, 0
      %s118 = sadd.s32 %s117, 1
      %s119 = scalar_select %p116, %s117, %s118
      %p122 = pneg %p116
      %p123 = scmp.eq.s32.totalorder %s18, 1
      %p124 = por %p122, %p123
      %p125 = scmp.ne.s32.totalorder %s117, %s120
      %p126 = scmp.eq.s32.totalorder %s18, 0
      %p127 = por %p125, %p126
      %p128 = scmp.ne.s32.totalorder %s117, %s120
      %p129 = scmp.eq.s32.totalorder %s23, 1
      %p130 = por %p128, %p129
      %p131 = scmp.ne.s32.totalorder %s120, %s121
      %p132 = scmp.eq.s32.totalorder %s23, 0
      %p133 = por %p131, %p132
      %p134 = scmp.ne.s32.totalorder %s120, %s121
      %p135 = scmp.eq.s32.totalorder %s24, 1
      %p136 = por %p134, %p135
      %p138 = scmp.ne.s32.totalorder %s121, %s137
      %p139 = scmp.eq.s32.totalorder %s24, 0
      %p140 = por %p138, %p139
      %p141 = scmp.le.s32.totalorder 1, %s18
      %p142 = scmp.lt.s32.totalorder %s18, 3
      %p143 = pnand %p141, %p142
      %p144 = pneg %p143
      // Predicated region
      $region9: #{tpu_custom_call.1} parent=5 // pred_check
        _
      $region10: #{tpu_custom_call.1} parent=5 // pred_check_branch
        %146 = sbr.rel (%p143) target = $region12
      $region11: #{tpu_custom_call.1} parent=5 // pred_region
        %s147 = ssub.s32 %s18, 1
        // Predicated region
        $region13: #{tpu_custom_call.1} parent=11 // pred_check
          %p148 = pneg %p65
        $region14: #{tpu_custom_call.1} parent=11 // pred_check_branch
          %150 = sbr.rel (%p148) target = $region16
        $region15: #{tpu_custom_call.1} parent=11 // pred_region
          %152 = vsyncadd [#allocation6], 0
          %s153 = sshll.u32 %s1, 4
          %s154 = int_to_ptr.hbm [resolvable:$true] %s153
          %s155 = sshll.u32 [#allocation5], 4
          %s156 = int_to_ptr.vmem [resolvable:$true] %s155
          %161 = dma.hbm_to_vmem [thread:$0]  %s154, 256, %s156, [#allocation6], 64, 64, 4
        $region16: #{tpu_custom_call.1} parent=11 // pred_fallthru
          _
        // Predicated region
        $region17: #{tpu_custom_call.1} parent=11 // pred_check
          %p162 = pneg %p86
        $region18: #{tpu_custom_call.1} parent=11 // pred_check_branch
          %164 = sbr.rel (%p162) target = $region20
        $region19: #{tpu_custom_call.1} parent=11 // pred_region
          %166 = vsyncadd [#allocation6], 0
          %s167 = sshll.u32 %s2, 4
          %s168 = int_to_ptr.hbm [resolvable:$true] %s167
          %s169 = sshll.u32 [#allocation7], 4
          %s170 = int_to_ptr.vmem [resolvable:$true] %s169
          %175 = dma.hbm_to_vmem [thread:$0]  %s168, 256, %s170, [#allocation6], 64, 64, 4
        $region20: #{tpu_custom_call.1} parent=11 // pred_fallthru
          _
        // Predicated region
        $region21: #{tpu_custom_call.1} parent=11 // pred_check
          %p176 = pneg %p107
        $region22: #{tpu_custom_call.1} parent=11 // pred_check_branch
          %178 = sbr.rel (%p176) target = $region24
        $region23: #{tpu_custom_call.1} parent=11 // pred_region
          %180 = vsyncadd [#allocation9], 0
          %s181 = sshll.u32 %s3, 4
          %s182 = int_to_ptr.hbm [resolvable:$true] %s181
          %s183 = sshll.u32 [#allocation8], 4
          %s184 = int_to_ptr.vmem [resolvable:$true] %s183
          %189 = dma.hbm_to_vmem [thread:$0]  %s182, 256, %s184, [#allocation9], 64, 64, 4
        $region24: #{tpu_custom_call.1} parent=11 // pred_fallthru
          _
      $region12: #{tpu_custom_call.1} parent=5 // pred_fallthru
        _
      %p190 = scmp.lt.s32.totalorder %s18, 2
      // Predicated region
      $region25: #{tpu_custom_call.1} parent=5 // pred_check
        %p191 = pneg %p190
      $region26: #{tpu_custom_call.1} parent=5 // pred_check_branch
        %193 = sbr.rel (%p191) target = $region28
      $region27: #{tpu_custom_call.1} parent=5 // pred_region
        // Predicated region
        $region29: #{tpu_custom_call.1} parent=27 // pred_check
          %p194 = pneg %p38
        $region30: #{tpu_custom_call.1} parent=27 // pred_check_branch
          %196 = sbr.rel (%p194) target = $region32
        $region31: #{tpu_custom_call.1} parent=27 // pred_region
          %s197 = sand.u32 %s28, 1
          %s198 = scalar_lea.sflag [#allocation3], %s197
          %s199 = sand.u32 %s28, 1
          %s200 = smul.addr %s199, 4
          %s201 = scalar_lea.vmem [#allocation2], %s200
          %203 = vsyncadd %s198, 0
          %s204 = smul.addr %s18, 4
          %s205 = scalar_lea.hbm %s0, %s204
          %s207 = sshll.u32 %s205, 4
          %s208 = int_to_ptr.hbm [resolvable:$true] %s207
          %s209 = sshll.u32 %s201, 4
          %s210 = int_to_ptr.vmem [resolvable:$true] %s209
          %212 = dma.hbm_to_vmem [thread:$0]  %s208, 64, %s210, %s198
        $region32: #{tpu_custom_call.1} parent=27 // pred_fallthru
          _
      $region28: #{tpu_custom_call.1} parent=5 // pred_fallthru
        _
      %p213 = scmp.le.s32.totalorder 1, %s18
      %p214 = scmp.lt.s32.totalorder %s18, 3
      %p215 = pnand %p213, %p214
      %p216 = pneg %p215
      // Predicated region
      $region33: #{tpu_custom_call.1} parent=5 // pred_check
        _
      $region34: #{tpu_custom_call.1} parent=5 // pred_check_branch
        %218 = sbr.rel (%p215) target = $region36
      $region35: #{tpu_custom_call.1} parent=5 // pred_region
        %s219 = ssub.s32 %s18, 1
        %s220 = sand.u32 %s31, 1
        %s221 = scalar_lea.sflag [#allocation3], %s220
        %s222 = sand.u32 %s31, 1
        %s223 = smul.addr %s222, 4
        %s224 = scalar_lea.vmem [#allocation2], %s223
        // Predicated region
        $region37: #{tpu_custom_call.1} parent=35 // pred_check
          %p225 = pneg %p44
        $region38: #{tpu_custom_call.1} parent=35 // pred_check_branch
          %227 = sbr.rel (%p225) target = $region40
        $region39: #{tpu_custom_call.1} parent=35 // pred_region
          %229 = dma.done %s221, 64
        $region40: #{tpu_custom_call.1} parent=35 // pred_fallthru
          _
        // Predicated region
        $region41: #{tpu_custom_call.1} parent=35 // pred_check
          %p230 = pneg %p65
        $region42: #{tpu_custom_call.1} parent=35 // pred_check_branch
          %232 = sbr.rel (%p230) target = $region44
        $region43: #{tpu_custom_call.1} parent=35 // pred_region
          %234 = dma.done [#allocation6], 256
        $region44: #{tpu_custom_call.1} parent=35 // pred_fallthru
          _
        // Predicated region
        $region45: #{tpu_custom_call.1} parent=35 // pred_check
          %p235 = pneg %p86
        $region46: #{tpu_custom_call.1} parent=35 // pred_check_branch
          %237 = sbr.rel (%p235) target = $region48
        $region47: #{tpu_custom_call.1} parent=35 // pred_region
          %239 = dma.done [#allocation6], 256
        $region48: #{tpu_custom_call.1} parent=35 // pred_fallthru
          _
        // Predicated region
        $region49: #{tpu_custom_call.1} parent=35 // pred_check
          %p240 = pneg %p107
        $region50: #{tpu_custom_call.1} parent=35 // pred_check_branch
          %242 = sbr.rel (%p240) target = $region52
        $region51: #{tpu_custom_call.1} parent=35 // pred_region
          %244 = dma.done [#allocation9], 256
        $region52: #{tpu_custom_call.1} parent=35 // pred_fallthru
          _
        %s245 = sand.u32 %s31, 1
        %s246 = scalar_lea.sflag [#allocation3], %s245
        %s247 = sand.u32 %s31, 1
        %s248 = smul.addr %s247, 4
        %s249 = scalar_lea.vmem [#allocation2], %s248
        %p250 = pneg %p44
        %p251 = pneg %p41
        %p252 = pneg %p65
        %p253 = pneg %p62
        %p254 = pneg %p86
        %p255 = pneg %p83
        %p256 = pneg %p107
        %p257 = pneg %p104
        %p258 = pneg %p133
        %p259 = pneg %p130
        %s260 = sand.u32 %s120, 1
        %s261 = scalar_lea.sflag [#allocation4], %s260
        %s262 = sand.u32 %s120, 1
        %s263 = smul.addr %s262, 4
        %s264 = scalar_lea.vmem [#allocation10], %s263
        %v266 = vld [vmem:[%s224] sm:$0xf]
        %v267 = vld [vmem:[#allocation5] sm:$0xf]
        %v268 = vld [vmem:[#allocation5 + $0x4] sm:$0xf]
        %v269 = vld [vmem:[#allocation5 + $0x8] sm:$0xf]
        %v270 = vld [vmem:[#allocation5 + $0xc] sm:$0xf]
        %v275 = vunpack.c.l.b16 %v267
        %v276 = vunpack.c.l.b16 %v268
        %v277 = vunpack.c.l.b16 %v269
        %v278 = vunpack.c.l.b16 %v270
        %v279 = vpack.c.b16 %v276, %v275
        %v280 = vpack.c.b16 %v278, %v277
        %vm283 = vcmask 261120
        %v285 = vsel %vm283, %v266, 0
        %287 = vmatpush.bf16.msra.mxu0 0
        %288 = vmatpush.bf16.msra.mxu0 0
        %289 = vmatpush.bf16.msra.mxu0 0
        %290 = vmatpush.bf16.msra.mxu0 0
        %291 = vmatpush.bf16.msra.mxu0 0
        %292 = vmatpush.bf16.msra.mxu0 0
        %293 = vmatpush.bf16.msra.mxu0 %v280
        %294 = vmatpush.bf16.msra.mxu0 %v279
        %295 = vmatmul.bf16.gmra.mxu0 %v285
        %v296 = vpop.f32.mrf.mxu0
        %v297 = vadd.f32 0.0, %v296
        %v298 = vpop.f32.mrf.mxu0
        %299 = vdwg.mxu0
        %v300 = vpack.c.bf16 %v297, %v297
        %v301 = vld [vmem:[#allocation7] sm:$0xf]
        %v302 = vld [vmem:[#allocation7 + $0x4] sm:$0xf]
        %v303 = vld [vmem:[#allocation7 + $0x8] sm:$0xf]
        %v304 = vld [vmem:[#allocation7 + $0xc] sm:$0xf]
        %v309 = vunpack.c.l.b16 %v301
        %v310 = vunpack.c.l.b16 %v302
        %v311 = vunpack.c.l.b16 %v303
        %v312 = vunpack.c.l.b16 %v304
        %v313 = vpack.c.b16 %v310, %v309
        %v314 = vpack.c.b16 %v312, %v311
        %317 = vmatpush.bf16.msra.mxu0 0
        %318 = vmatpush.bf16.msra.mxu0 0
        %319 = vmatpush.bf16.msra.mxu0 0
        %320 = vmatpush.bf16.msra.mxu0 0
        %321 = vmatpush.bf16.msra.mxu0 0
        %322 = vmatpush.bf16.msra.mxu0 0
        %323 = vmatpush.bf16.msra.mxu0 %v314
        %324 = vmatpush.bf16.msra.mxu0 %v313
        %325 = vmatmul.bf16.gmra.mxu0 %v285
        %v326 = vpop.f32.mrf.mxu0
        %v327 = vadd.f32 0.0, %v326
        %v328 = vpop.f32.mrf.mxu0
        %329 = vdwg.mxu0
        %v330 = vpack.c.bf16 %v327, %v327
        %v331 = vld [vmem:[#allocation8] sm:$0xf]
        %v332 = vld [vmem:[#allocation8 + $0x4] sm:$0xf]
        %v333 = vld [vmem:[#allocation8 + $0x8] sm:$0xf]
        %v334 = vld [vmem:[#allocation8 + $0xc] sm:$0xf]
        %v339 = vunpack.c.l.b16 %v331
        %v340 = vunpack.c.l.b16 %v332
        %v341 = vunpack.c.l.b16 %v333
        %v342 = vunpack.c.l.b16 %v334
        %v343 = vpack.c.b16 %v340, %v339
        %v344 = vpack.c.b16 %v342, %v341
        %347 = vmatpush.bf16.msra.mxu0 0
        %348 = vmatpush.bf16.msra.mxu0 0
        %349 = vmatpush.bf16.msra.mxu0 0
        %350 = vmatpush.bf16.msra.mxu0 0
        %351 = vmatpush.bf16.msra.mxu0 0
        %352 = vmatpush.bf16.msra.mxu0 0
        %353 = vmatpush.bf16.msra.mxu0 %v344
        %354 = vmatpush.bf16.msra.mxu0 %v343
        %355 = vmatmul.bf16.gmra.mxu0 %v285
        %v356 = vpop.f32.mrf.mxu0
        %v357 = vadd.f32 0.0, %v356
        %v358 = vpop.f32.mrf.mxu0
        %359 = vdwg.mxu0
        %v360 = vpack.c.bf16 %v357, %v357
        %v361 = vlaneseq
        %v362 = vshrl.u32 %v361, 7
        %v363 = vlaneseq
        %v364 = vand.u32 %v363, 127
        %vm365 = vcmp.le.s32.totalorder %v364, %v362
        %vm366 = vcmask 64512
        %v368 = vsel %vm366, %v300, 0
        %v371 = vsel %vm366, %v330, 0
        %373 = vmatpush.bf16.xpose.msra.mxu0 0
        %374 = vmatpush.bf16.xpose.msra.mxu0 0
        %375 = vmatpush.bf16.xpose.msra.mxu0 0
        %376 = vmatpush.bf16.xpose.msra.mxu0 0
        %377 = vmatpush.bf16.xpose.msra.mxu0 0
        %378 = vmatpush.bf16.xpose.msra.mxu0 0
        %379 = vmatpush.bf16.xpose.msra.mxu0 0
        %380 = vmatpush.bf16.xpose.msra.mxu0 %v371
        %381 = vmatmul.bf16.gmra.mxu0 %v368
        %v382 = vpop.f32.mrf.mxu0
        %v383 = vadd.f32 0.0, %v382
        %v384 = vpop.f32.mrf.mxu0
        %385 = vdwg.mxu0
        %v386 = vsel %vm365, %v383, -inf
        %v387 = vsel %vm366, %v386, -inf
        %388 = vmax.xlane.f32.xlu0 %v387
        %v389 = vpop.xlane.xlu0 %388
        %v390 = vsub.f32 %v386, %v389
        %v391 = vmul.f32 %v390, 1.442695
        %v392 = vpow.pop %v391
        %v393 = vsel %vm366, %v392, 0.0
        %394 = vadd.xlane.f32.xlu0 %v393
        %v395 = vpop.xlane.xlu0 %394
        %v396 = vrcp.pop %v395
        %v397 = vmul.f32 %v392, %v396
        %v398 = vpack.c.bf16 %v397, %v397
        %v400 = vsel %vm366, %v398, 0
        %vm402 = vcmask 1043456
        %v404 = vsel %vm402, %v360, 0
        %406 = vmatpush.bf16.msra.mxu0 0
        %407 = vmatpush.bf16.msra.mxu0 0
        %408 = vmatpush.bf16.msra.mxu0 0
        %409 = vmatpush.bf16.msra.mxu0 0
        %410 = vmatpush.bf16.msra.mxu0 0
        %411 = vmatpush.bf16.msra.mxu0 0
        %412 = vmatpush.bf16.msra.mxu0 0
        %413 = vmatpush.bf16.msra.mxu0 %v404
        %414 = vmatmul.bf16.gmra.mxu0 %v400
        %v415 = vpop.f32.mrf.mxu0
        %v416 = vadd.f32 0.0, %v415
        %v417 = vpop.f32.mrf.mxu0
        %418 = vdwg.mxu0
        %v420 = vunpack.c.l.b16 %v300
        %v421 = vpack.c.b16 %v420, %v420
        %422 = vrot.lane.b32.xlu0 %v421, 120
        %v423 = vpop.permute.xlu0 %422
        %v425 = vunpack.c.l.b16 %v330
        %v426 = vpack.c.b16 %v425, %v425
        %427 = vrot.lane.b32.xlu0 %v426, 120
        %v428 = vpop.permute.xlu0 %427
        %v430 = vsel %vm366, %v423, 0
        %v433 = vsel %vm366, %v428, 0
        %435 = vmatpush.bf16.xpose.msra.mxu0 0
        %436 = vmatpush.bf16.xpose.msra.mxu0 0
        %437 = vmatpush.bf16.xpose.msra.mxu0 0
        %438 = vmatpush.bf16.xpose.msra.mxu0 0
        %439 = vmatpush.bf16.xpose.msra.mxu0 0
        %440 = vmatpush.bf16.xpose.msra.mxu0 0
        %441 = vmatpush.bf16.xpose.msra.mxu0 0
        %442 = vmatpush.bf16.xpose.msra.mxu0 %v433
        %443 = vmatmul.bf16.gmra.mxu0 %v430
        %v444 = vpop.f32.mrf.mxu0
        %v445 = vadd.f32 0.0, %v444
        %v446 = vpop.f32.mrf.mxu0
        %447 = vdwg.mxu0
        %v448 = vsel %vm365, %v445, -inf
        %v449 = vsel %vm366, %v448, -inf
        %450 = vmax.xlane.f32.xlu0 %v449
        %v451 = vpop.xlane.xlu0 %450
        %v452 = vsub.f32 %v448, %v451
        %v453 = vmul.f32 %v452, 1.442695
        %v454 = vpow.pop %v453
        %v455 = vsel %vm366, %v454, 0.0
        %456 = vadd.xlane.f32.xlu0 %v455
        %v457 = vpop.xlane.xlu0 %456
        %v458 = vrcp.pop %v457
        %v459 = vmul.f32 %v454, %v458
        %v460 = vpack.c.bf16 %v459, %v459
        %v462 = vunpack.c.l.b16 %v360
        %v463 = vpack.c.b16 %v462, %v462
        %464 = vrot.lane.b32.xlu0 %v463, 120
        %v465 = vpop.permute.xlu0 %464
        %v467 = vsel %vm366, %v460, 0
        %v470 = vsel %vm402, %v465, 0
        %472 = vmatpush.bf16.msra.mxu0 0
        %473 = vmatpush.bf16.msra.mxu0 0
        %474 = vmatpush.bf16.msra.mxu0 0
        %475 = vmatpush.bf16.msra.mxu0 0
        %476 = vmatpush.bf16.msra.mxu0 0
        %477 = vmatpush.bf16.msra.mxu0 0
        %478 = vmatpush.bf16.msra.mxu0 0
        %479 = vmatpush.bf16.msra.mxu0 %v470
        %480 = vmatmul.bf16.gmra.mxu0 %v467
        %v481 = vpop.f32.mrf.mxu0
        %v482 = vadd.f32 0.0, %v481
        %v483 = vpop.f32.mrf.mxu0
        %484 = vdwg.mxu0
        %485 = vrot.lane.b32.xlu0 %v421, 112
        %v486 = vpop.permute.xlu0 %485
        %487 = vrot.lane.b32.xlu0 %v426, 112
        %v488 = vpop.permute.xlu0 %487
        %v490 = vsel %vm366, %v486, 0
        %v493 = vsel %vm366, %v488, 0
        %495 = vmatpush.bf16.xpose.msra.mxu0 0
        %496 = vmatpush.bf16.xpose.msra.mxu0 0
        %497 = vmatpush.bf16.xpose.msra.mxu0 0
        %498 = vmatpush.bf16.xpose.msra.mxu0 0
        %499 = vmatpush.bf16.xpose.msra.mxu0 0
        %500 = vmatpush.bf16.xpose.msra.mxu0 0
        %501 = vmatpush.bf16.xpose.msra.mxu0 0
        %502 = vmatpush.bf16.xpose.msra.mxu0 %v493
        %503 = vmatmul.bf16.gmra.mxu0 %v490
        %v504 = vpop.f32.mrf.mxu0
        %v505 = vadd.f32 0.0, %v504
        %v506 = vpop.f32.mrf.mxu0
        %507 = vdwg.mxu0
        %v508 = vsel %vm365, %v505, -inf
        %v509 = vsel %vm366, %v508, -inf
        %510 = vmax.xlane.f32.xlu0 %v509
        %v511 = vpop.xlane.xlu0 %510
        %v512 = vsub.f32 %v508, %v511
        %v513 = vmul.f32 %v512, 1.442695
        %v514 = vpow.pop %v513
        %v515 = vsel %vm366, %v514, 0.0
        %516 = vadd.xlane.f32.xlu0 %v515
        %v517 = vpop.xlane.xlu0 %516
        %v518 = vrcp.pop %v517
        %v519 = vmul.f32 %v514, %v518
        %v520 = vpack.c.bf16 %v519, %v519
        %521 = vrot.lane.b32.xlu0 %v463, 112
        %v522 = vpop.permute.xlu0 %521
        %v524 = vsel %vm366, %v520, 0
        %v527 = vsel %vm402, %v522, 0
        %529 = vmatpush.bf16.msra.mxu0 0
        %530 = vmatpush.bf16.msra.mxu0 0
        %531 = vmatpush.bf16.msra.mxu0 0
        %532 = vmatpush.bf16.msra.mxu0 0
        %533 = vmatpush.bf16.msra.mxu0 0
        %534 = vmatpush.bf16.msra.mxu0 0
        %535 = vmatpush.bf16.msra.mxu0 0
        %536 = vmatpush.bf16.msra.mxu0 %v527
        %537 = vmatmul.bf16.gmra.mxu0 %v524
        %v538 = vpop.f32.mrf.mxu0
        %v539 = vadd.f32 0.0, %v538
        %v540 = vpop.f32.mrf.mxu0
        %541 = vdwg.mxu0
        %542 = vrot.lane.b32.xlu0 %v421, 104
        %v543 = vpop.permute.xlu0 %542
        %544 = vrot.lane.b32.xlu0 %v426, 104
        %v545 = vpop.permute.xlu0 %544
        %v547 = vsel %vm366, %v543, 0
        %v550 = vsel %vm366, %v545, 0
        %552 = vmatpush.bf16.xpose.msra.mxu0 0
        %553 = vmatpush.bf16.xpose.msra.mxu0 0
        %554 = vmatpush.bf16.xpose.msra.mxu0 0
        %555 = vmatpush.bf16.xpose.msra.mxu0 0
        %556 = vmatpush.bf16.xpose.msra.mxu0 0
        %557 = vmatpush.bf16.xpose.msra.mxu0 0
        %558 = vmatpush.bf16.xpose.msra.mxu0 0
        %559 = vmatpush.bf16.xpose.msra.mxu0 %v550
        %560 = vmatmul.bf16.gmra.mxu0 %v547
        %v561 = vpop.f32.mrf.mxu0
        %v562 = vadd.f32 0.0, %v561
        %v563 = vpop.f32.mrf.mxu0
        %564 = vdwg.mxu0
        %v565 = vsel %vm365, %v562, -inf
        %v566 = vsel %vm366, %v565, -inf
        %567 = vmax.xlane.f32.xlu0 %v566
        %v568 = vpop.xlane.xlu0 %567
        %v569 = vsub.f32 %v565, %v568
        %v570 = vmul.f32 %v569, 1.442695
        %v571 = vpow.pop %v570
        %v572 = vsel %vm366, %v571, 0.0
        %573 = vadd.xlane.f32.xlu0 %v572
        %v574 = vpop.xlane.xlu0 %573
        %v575 = vrcp.pop %v574
        %v576 = vmul.f32 %v571, %v575
        %v577 = vpack.c.bf16 %v576, %v576
        %578 = vrot.lane.b32.xlu0 %v463, 104
        %v579 = vpop.permute.xlu0 %578
        %v581 = vsel %vm366, %v577, 0
        %v584 = vsel %vm402, %v579, 0
        %586 = vmatpush.bf16.msra.mxu0 0
        %587 = vmatpush.bf16.msra.mxu0 0
        %588 = vmatpush.bf16.msra.mxu0 0
        %589 = vmatpush.bf16.msra.mxu0 0
        %590 = vmatpush.bf16.msra.mxu0 0
        %591 = vmatpush.bf16.msra.mxu0 0
        %592 = vmatpush.bf16.msra.mxu0 0
        %593 = vmatpush.bf16.msra.mxu0 %v584
        %594 = vmatmul.bf16.gmra.mxu0 %v581
        %v595 = vpop.f32.mrf.mxu0
        %v596 = vadd.f32 0.0, %v595
        %v597 = vpop.f32.mrf.mxu0
        %598 = vdwg.mxu0
        %600 = vrot.lane.b32.xlu0 %v482, 8
        %v601 = vpop.permute.xlu0 %600
        %604 = vrot.lane.b32.xlu0 %v539, 16
        %v605 = vpop.permute.xlu0 %604
        %608 = vrot.lane.b32.xlu0 %v596, 24
        %v609 = vpop.permute.xlu0 %608
        %v611 = vsel %vm366, %v416, %v601
        %vm612 = vcmask 130048
        %v613 = vsel %vm612, %v611, %v605
        %vm614 = vcmask 195584
        %v615 = vsel %vm614, %v613, %v609
        %v616 = vpack.c.bf16 %v615, %v615
        %vm617 = vcmask 257024
        %618 = vst.msk [vmem:[%s264] sm:$0xf] %vm617, %v616
        %s619 = sand.u32 %s120, 1
        %s620 = scalar_lea.sflag [#allocation4], %s619
        %s621 = sand.u32 %s120, 1
        %s622 = smul.addr %s621, 4
        %s623 = scalar_lea.vmem [#allocation10], %s622
        // Predicated region
        $region53: #{tpu_custom_call.1} parent=35 // pred_check
          %p624 = pneg %p130
        $region54: #{tpu_custom_call.1} parent=35 // pred_check_branch
          %626 = sbr.rel (%p624) target = $region56
        $region55: #{tpu_custom_call.1} parent=35 // pred_region
          %628 = vsyncadd %s620, 0
          %s629 = smul.addr %s23, 4
          %s630 = scalar_lea.hbm %s4, %s629
          %s632 = sshll.u32 %s623, 4
          %s633 = int_to_ptr.vmem [resolvable:$true] %s632
          %s634 = sshll.u32 %s630, 4
          %s635 = int_to_ptr.hbm [resolvable:$true] %s634
          %637 = dma.vmem_to_hbm [thread:$0]  %s633, 64, %s635, %s620
        $region56: #{tpu_custom_call.1} parent=35 // pred_fallthru
          _
      $region36: #{tpu_custom_call.1} parent=5 // pred_fallthru
        _
      %p638 = scmp.le.s32.totalorder 2, %s18
      // Predicated region
      $region57: #{tpu_custom_call.1} parent=5 // pred_check
        %p639 = pneg %p638
      $region58: #{tpu_custom_call.1} parent=5 // pred_check_branch
        %641 = sbr.rel (%p639) target = $region60
      $region59: #{tpu_custom_call.1} parent=5 // pred_region
        %s642 = ssub.s32 %s18, 2
        // Predicated region
        $region61: #{tpu_custom_call.1} parent=59 // pred_check
          %p643 = pneg %p136
        $region62: #{tpu_custom_call.1} parent=59 // pred_check_branch
          %645 = sbr.rel (%p643) target = $region64
        $region63: #{tpu_custom_call.1} parent=59 // pred_region
          %s646 = sand.u32 %s121, 1
          %s647 = scalar_lea.sflag [#allocation4], %s646
          %s648 = sand.u32 %s121, 1
          %s649 = smul.addr %s648, 4
          %s650 = scalar_lea.vmem [#allocation10], %s649
          %652 = dma.done %s647, 64
        $region64: #{tpu_custom_call.1} parent=59 // pred_fallthru
          _
      $region60: #{tpu_custom_call.1} parent=5 // pred_fallthru
        _
    $region6: #{tpu_custom_call.1} parent=1 // loop_footer
      %s22 = sadd.s32 1, %s18
    $region7: #{tpu_custom_call.1} parent=1 // loop_footer_branch
      %17 = sbr.rel target = $region3
    $region8: #{tpu_custom_call.1} parent=1 // loop_exit
      _
    %653 = vsyncpa [#allocation3], 1
    %s654 = scalar_lea.sflag [#allocation3], 1
    %655 = vsyncpa %s654, 1
    %656 = vsyncpa [#allocation6], 1
    %657 = vsyncpa [#allocation9], 1
    %658 = vsyncpa [#allocation4], 1
    %s659 = scalar_lea.sflag [#allocation4], 1
    %660 = vsyncpa %s659, 1

</llo_original>
